<compile_context>
chip_gen: v7x
topology: tpu7x:2x2x1
jax: 0.10.0
libtpu: 0.0.40
codegen_flags: <defaults>
</compile_context>

<pallas_src>
import functools

import jax
import jax.numpy as jnp
from jax.experimental import pallas as pl
from jax.experimental.pallas import tpu as pltpu


def _basic_unit_kernel(x_ref, w_ref, b_ref, o_ref, *, L):
    # x_ref : (1, Cin, nb*L)   nb samples folded onto the lane axis
    # w_ref : (2*Cout, 3*Cin)  fused im2col weights: w[o, k*Cin + i] = w_torch[o, i, k]
    # b_ref : (2*Cout, 1)      fused biases (column; broadcasts over lanes)
    # o_ref : (1, Cout, nb*L)
    _, cin, nbL = x_ref.shape
    cout = o_ref.shape[1]

    x = x_ref[0]                                               # (Cin, nbL)
    lane = jax.lax.broadcasted_iota(jnp.int32, (cin, nbL), 1)

    # Conv taps within each folded sample of length L:
    #   k=0 tap -> x[:, l-1]  (zero at each sample's l == 0)
    #   k=2 tap -> x[:, l+1]  (zero at each sample's l == L-1)
    # pltpu.roll only accepts non-negative shifts: rotate by +1 and by
    # +(nbL-1) (== -1 mod nbL).  The wrapped columns — including those that
    # crossed a sample boundary — are masked via lane % L.
    x_lo = jnp.where(lane % L == 0, 0.0, pltpu.roll(x, shift=1, axis=1))
    x_hi = jnp.where(lane % L == L - 1, 0.0, pltpu.roll(x, shift=nbL - 1, axis=1))
    x_im2col = jnp.concatenate([x_lo, x, x_hi], axis=0)        # (3*Cin, nbL), tap-major

    # One MXU matmul for both convolutions over the whole lane-dense slab.
    y = jnp.dot(w_ref[...], x_im2col,
                preferred_element_type=jnp.float32) + b_ref[...]   # (2*Cout, nbL)

    g1 = jax.nn.sigmoid(y[:cout])                              # EUP exp + reciprocal
    g2 = jnp.maximum(y[cout:], 0.0)
    o_ref[0] = (g1 * g2).astype(o_ref.dtype)


def _pick_batch_block(N, Cin, Cout, L, itemsize):
    """Number of batch samples folded onto the lane axis per grid step.

    Targets:
      * nb*L >= 128 when possible (unmasked, lane-dense output stores),
      * ~2 MiB of HBM traffic per step (amortizes ~0.35us/step grid overhead),
      * double-buffered I/O + live f32 intermediates comfortably under
        v7x's 32 MiB scoped VMEM default.
    nb must divide N so the grid tiles evenly.
    """
    per_sample_io = (Cin + Cout) * L * itemsize                # input + output block
    per_sample_live = (6 * Cin + 5 * Cout) * L * 4             # x/taps/im2col/y/gates (f32)
    vmem_cap = 20 * 2 ** 20                                    # headroom under 32 MiB
    nb_vmem = max(1, vmem_cap // max(1, 2 * per_sample_io + per_sample_live))
    nb_io = max(1, (2 * 2 ** 20) // max(1, per_sample_io))     # ~2 MiB/step target
    nb_lane = -(-128 // L)                                     # ceil(128 / L)
    target = min(nb_vmem, max(nb_io, nb_lane))
    divisors = [d for d in range(1, N + 1) if N % d == 0]
    return max(d for d in divisors if d <= target)


def basic_unit(x_ncl, w1, b1, w2, b2):
    """x_ncl: (N, Cin, L); w*: (Cout, Cin, 3) PyTorch layout; b*: (Cout,)."""
    N, Cin, L = x_ncl.shape
    Cout = w1.shape[0]
    itemsize = jnp.dtype(x_ncl.dtype).itemsize

    # Fused, im2col-flattened parameters (tiny tensors; done once outside the
    # kernel):  W_im2col[o, k*Cin + i] = w_torch[o, i, k].
    w_cat = jnp.concatenate([w1, w2], axis=0)                  # (2Cout, Cin, 3)
    w_im2col = jnp.transpose(w_cat, (0, 2, 1)).reshape(2 * Cout, 3 * Cin)
    b_col = jnp.concatenate([b1, b2], axis=0).reshape(2 * Cout, 1)

    nb = _pick_batch_block(N, Cin, Cout, L, itemsize)
    G = N // nb
    nbL = nb * L

    # Fold nb samples onto the lane axis (one cheap layout pass wrapper-side),
    # so the kernel's matmul and output store see a lane-dense last dim.
    x_folded = (x_ncl.reshape(G, nb, Cin, L)
                .transpose(0, 2, 1, 3)
                .reshape(G, Cin, nbL))

    out_folded = pl.pallas_call(
        functools.partial(_basic_unit_kernel, L=L),
        out_shape=jax.ShapeDtypeStruct((G, Cout, nbL), x_ncl.dtype),
        grid_spec=pl.GridSpec(
            grid=(G,),
            in_specs=[
                pl.BlockSpec((1, Cin, nbL), lambda b: (b, 0, 0)),
                pl.BlockSpec((2 * Cout, 3 * Cin), lambda b: (0, 0)),
                pl.BlockSpec((2 * Cout, 1), lambda b: (0, 0)),
            ],
            out_specs=pl.BlockSpec((1, Cout, nbL), lambda b: (b, 0, 0)),
        ),
        compiler_params=pltpu.CompilerParams(
            dimension_semantics=("parallel",)),
    )(x_folded, w_im2col, b_col)

    # Unfold back to PyTorch's (N, Cout, L) layout.
    return (out_folded.reshape(G, Cout, nb, L)
            .transpose(0, 2, 1, 3)
            .reshape(N, Cout, L))


def _reference(x_ncl, w1, b1, w2, b2):
    """Pure-JAX reference mirroring torch Conv1d (k=3, pad=1)."""
    x_pad = jnp.pad(x_ncl, ((0, 0), (0, 0), (1, 1)))           # (N, Cin, L+2)
    L = x_ncl.shape[-1]

    def conv(w, b):
        # out[n, o, l] = sum_{i,k} x_pad[n, i, l+k] * w[o, i, k] + b[o]
        taps = jnp.stack([x_pad[:, :, k:k + L] for k in range(3)], axis=-1)
        y = jnp.einsum("nilk,oik->nol", taps, w)
        return y + b[None, :, None]

    g1 = jax.nn.sigmoid(conv(w1, b1))
    g2 = jnp.maximum(conv(w2, b2), 0.0)
    return g1 * g2


if __name__ == "__main__":
    N, Cin, Cout, L = 2, 32, 32, 16   # module doc says 32 in / 32 out channels

    key = jax.random.PRNGKey(0)
    kx, kw1, kb1, kw2, kb2 = jax.random.split(key, 5)
    x = jax.random.normal(kx, (N, Cin, L), dtype=jnp.float32)
    # deterministic synthetic params (PyTorch Conv1d weight layout: Cout, Cin, K)
    w1 = jax.random.normal(kw1, (Cout, Cin, 3), dtype=jnp.float32) * 0.1
    b1 = jax.random.normal(kb1, (Cout,), dtype=jnp.float32) * 0.1
    w2 = jax.random.normal(kw2, (Cout, Cin, 3), dtype=jnp.float32) * 0.1
    b2 = jax.random.normal(kb2, (Cout,), dtype=jnp.float32) * 0.1

    out = basic_unit(x, w1, b1, w2, b2)
    jax.block_until_ready(out)

    ref = _reference(x, w1, b1, w2, b2)
    assert out.shape == (N, Cout, L), out.shape
    assert jnp.allclose(out, ref, atol=1e-5, rtol=1e-5), float(
        jnp.max(jnp.abs(out - ref)))

    print("KERNEL_OK")
</pallas_src>

<mosaic_0001>
module attributes {stable_mosaic.version = 11 : i64} {
  func.func @_basic_unit_kernel(%arg0: i32, %arg1: memref<1x32x32xf32, #tpu.memory_space<vmem>>, %arg2: memref<64x96xf32, #tpu.memory_space<vmem>>, %arg3: memref<64x1xf32, #tpu.memory_space<vmem>>, %arg4: memref<1x32x32xf32, #tpu.memory_space<vmem>>) attributes {dimension_semantics = [#tpu.dimension_semantics<parallel>], iteration_bounds = array<i64: 1>, scalar_prefetch = 0 : i64, scratch_operands = 0 : i64, tpu.core_type = #tpu.core_type<tc>, window_params = [{transform_indices = @transform_0, window_bounds = array<i64: 1, 32, 32>}, {pipeline_mode = #tpu.pipeline_mode<synchronous>, transform_indices = @transform_1, window_bounds = array<i64: 64, 96>}, {pipeline_mode = #tpu.pipeline_mode<synchronous>, transform_indices = @transform_2, window_bounds = array<i64: 64, 1>}, {transform_indices = @transform_3, window_bounds = array<i64: 1, 32, 32>}]} {
    %c0 = arith.constant 0 : index
    %c0_0 = arith.constant 0 : index
    %c0_1 = arith.constant 0 : index
    %0 = vector.load %arg1[%c0, %c0_0, %c0_1] : memref<1x32x32xf32, #tpu.memory_space<vmem>>, vector<1x32x32xf32>
    %1 = vector.shape_cast %0 : vector<1x32x32xf32> to vector<32x32xf32>
    %2 = tpu.iota {dimensions = array<i32: 1>} : vector<32x32xi32>
    %c16_i32 = arith.constant 16 : i32
    %c0_i32 = arith.constant 0 : i32
    %3 = arith.cmpi eq, %c16_i32, %c0_i32 : i32
    %c1_i32 = arith.constant 1 : i32
    %4 = arith.select %3, %c1_i32, %c16_i32 : i32
    %5 = vector.broadcast %4 : i32 to vector<32x32xi32>
    %6 = arith.remsi %2, %5 : vector<32x32xi32>
    %c0_i32_2 = arith.constant 0 : i32
    %7 = vector.broadcast %c0_i32_2 : i32 to vector<32x32xi32>
    %8 = arith.cmpi ne, %6, %7 : vector<32x32xi32>
    %c0_i32_3 = arith.constant 0 : i32
    %9 = vector.broadcast %c0_i32_3 : i32 to vector<32x32xi32>
    %10 = arith.cmpi slt, %6, %9 : vector<32x32xi32>
    %c0_i32_4 = arith.constant 0 : i32
    %11 = arith.cmpi slt, %4, %c0_i32_4 : i32
    %12 = vector.broadcast %11 : i1 to vector<32x32xi1>
    %13 = vector.broadcast %12 : vector<32x32xi1> to vector<32x32xi1>
    %14 = arith.xori %10, %13 : vector<32x32xi1>
    %15 = arith.andi %14, %8 : vector<32x32xi1>
    %16 = vector.broadcast %4 : i32 to vector<32x32xi32>
    %17 = arith.addi %6, %16 : vector<32x32xi32>
    %18 = arith.select %15, %17, %6 : vector<32x32xi1>, vector<32x32xi32>
    %c0_i32_5 = arith.constant 0 : i32
    %19 = vector.broadcast %c0_i32_5 : i32 to vector<32x32xi32>
    %20 = arith.cmpi eq, %18, %19 : vector<32x32xi32>
    %c1_i32_6 = arith.constant 1 : i32
    %21 = tpu.dynamic_rotate %1 by %c1_i32_6 dim 1 : vector<32x32xf32>, i32 -> vector<32x32xf32>
    %cst = arith.constant 0.000000e+00 : f32
    %22 = vector.broadcast %cst : f32 to vector<32x32xf32>
    %23 = arith.select %20, %22, %21 : vector<32x32xi1>, vector<32x32xf32>
    %c16_i32_7 = arith.constant 16 : i32
    %c0_i32_8 = arith.constant 0 : i32
    %24 = arith.cmpi eq, %c16_i32_7, %c0_i32_8 : i32
    %c1_i32_9 = arith.constant 1 : i32
    %25 = arith.select %24, %c1_i32_9, %c16_i32_7 : i32
    %26 = vector.broadcast %25 : i32 to vector<32x32xi32>
    %27 = arith.remsi %2, %26 : vector<32x32xi32>
    %c0_i32_10 = arith.constant 0 : i32
    %28 = vector.broadcast %c0_i32_10 : i32 to vector<32x32xi32>
    %29 = arith.cmpi ne, %27, %28 : vector<32x32xi32>
    %c0_i32_11 = arith.constant 0 : i32
    %30 = vector.broadcast %c0_i32_11 : i32 to vector<32x32xi32>
    %31 = arith.cmpi slt, %27, %30 : vector<32x32xi32>
    %c0_i32_12 = arith.constant 0 : i32
    %32 = arith.cmpi slt, %25, %c0_i32_12 : i32
    %33 = vector.broadcast %32 : i1 to vector<32x32xi1>
    %34 = vector.broadcast %33 : vector<32x32xi1> to vector<32x32xi1>
    %35 = arith.xori %31, %34 : vector<32x32xi1>
    %36 = arith.andi %35, %29 : vector<32x32xi1>
    %37 = vector.broadcast %25 : i32 to vector<32x32xi32>
    %38 = arith.addi %27, %37 : vector<32x32xi32>
    %39 = arith.select %36, %38, %27 : vector<32x32xi1>, vector<32x32xi32>
    %c15_i32 = arith.constant 15 : i32
    %40 = vector.broadcast %c15_i32 : i32 to vector<32x32xi32>
    %41 = arith.cmpi eq, %39, %40 : vector<32x32xi32>
    %c31_i32 = arith.constant 31 : i32
    %42 = tpu.dynamic_rotate %1 by %c31_i32 dim 1 : vector<32x32xf32>, i32 -> vector<32x32xf32>
    %cst_13 = arith.constant 0.000000e+00 : f32
    %43 = vector.broadcast %cst_13 : f32 to vector<32x32xf32>
    %44 = arith.select %41, %43, %42 : vector<32x32xi1>, vector<32x32xf32>
    %45 = tpu.concatenate %23, %1, %44 in 0 : vector<32x32xf32>, vector<32x32xf32>, vector<32x32xf32> -> vector<96x32xf32>
    %c0_14 = arith.constant 0 : index
    %c0_15 = arith.constant 0 : index
    %46 = vector.load %arg2[%c0_14, %c0_15] : memref<64x96xf32, #tpu.memory_space<vmem>>, vector<64x96xf32>
    %cst_16 = arith.constant dense<0.000000e+00> : vector<64x32xf32>
    %47 = tpu.matmul %46, %45, %cst_16 {dimension_numbers = #tpu.dot_dimension_numbers<[1], [0], [0], [1], [0, 0, 1, 1], [], []>} : vector<64x96xf32>, vector<96x32xf32>, vector<64x32xf32> -> vector<64x32xf32>
    %c0_17 = arith.constant 0 : index
    %c0_18 = arith.constant 0 : index
    %48 = vector.load %arg3[%c0_17, %c0_18] : memref<64x1xf32, #tpu.memory_space<vmem>>, vector<64x1xf32>
    %49 = vector.broadcast %48 : vector<64x1xf32> to vector<64x32xf32>
    %50 = arith.addf %47, %49 : vector<64x32xf32>
    %51 = vector.extract_strided_slice %50 {offsets = [0, 0], sizes = [32, 32], strides = [1, 1]} : vector<64x32xf32> to vector<32x32xf32>
    %52 = arith.negf %51 : vector<32x32xf32>
    %53 = math.exp %52 : vector<32x32xf32>
    %cst_19 = arith.constant 1.000000e+00 : f32
    %54 = vector.broadcast %cst_19 : f32 to vector<32x32xf32>
    %55 = arith.addf %54, %53 : vector<32x32xf32>
    %56 = arith.divf %54, %55 : vector<32x32xf32>
    %57 = vector.extract_strided_slice %50 {offsets = [32, 0], sizes = [32, 32], strides = [1, 1]} : vector<64x32xf32> to vector<32x32xf32>
    %cst_20 = arith.constant 0.000000e+00 : f32
    %58 = vector.broadcast %cst_20 : f32 to vector<32x32xf32>
    %59 = arith.maximumf %57, %58 : vector<32x32xf32>
    %60 = arith.mulf %56, %59 : vector<32x32xf32>
    %c0_21 = arith.constant 0 : index
    %c0_22 = arith.constant 0 : index
    %c0_23 = arith.constant 0 : index
    %61 = vector.load %arg4[%c0_21, %c0_22, %c0_23] : memref<1x32x32xf32, #tpu.memory_space<vmem>>, vector<1x32x32xf32>
    %62 = vector.shape_cast %61 : vector<1x32x32xf32> to vector<32x32xf32>
    %63 = vector.shape_cast %60 : vector<32x32xf32> to vector<1x32x32xf32>
    tpu.vector_store %arg4[%c0_21, %c0_22, %c0_23], %63 {strides = array<i32>} : memref<1x32x32xf32, #tpu.memory_space<vmem>>, vector<1x32x32xf32>,
    return
  }
  func.func @transform_0(%arg0: i32) -> (i32, i32, i32) {
    %c0_i32 = arith.constant 0 : i32
    %c0_i32_0 = arith.constant 0 : i32
    %c0_i32_1 = arith.constant 0 : i32
    return %arg0, %c0_i32, %c0_i32_0 : i32, i32, i32
  }
  func.func @transform_1(%arg0: i32) -> (i32, i32) {
    %c0_i32 = arith.constant 0 : i32
    %c0_i32_0 = arith.constant 0 : i32
    %c0_i32_1 = arith.constant 0 : i32
    return %c0_i32, %c0_i32_0 : i32, i32
  }
  func.func @transform_2(%arg0: i32) -> (i32, i32) {
    %c0_i32 = arith.constant 0 : i32
    %c0_i32_0 = arith.constant 0 : i32
    %c0_i32_1 = arith.constant 0 : i32
    return %c0_i32, %c0_i32_0 : i32, i32
  }
  func.func @transform_3(%arg0: i32) -> (i32, i32, i32) {
    %c0_i32 = arith.constant 0 : i32
    %c0_i32_0 = arith.constant 0 : i32
    %c0_i32_1 = arith.constant 0 : i32
    return %arg0, %c0_i32, %c0_i32_0 : i32, i32, i32
  }
}

</mosaic_0001>

<llo_original>
// kernel: tpu_custom_call.1
$region0: #{tpu_custom_call.1}
  #allocation0 [shape = 'u32[]', space=smem, size = 0x4, offset = 0x4, fixed_abs, tag = 'smem constant byte address 0x4 - core index']
  #allocation1 [shape = 'u32[144,128]{1,0:T(1,128)}', space=vmem, size = 0x12000, scoped, tag = 'internal scratch']
  %s0 = inlined_call_operand.hbm [shape: f32[1,32,32], index: 0, kind: input, shape index: {}]
  %s1 = inlined_call_operand.vmem [shape: f32[64,96], index: 1, kind: input, shape index: {}]
  %s2 = inlined_call_operand.vmem [shape: f32[64,1], index: 2, kind: input, shape index: {}]
  %s3 = inlined_call_operand.hbm [shape: f32[1,32,32], index: 3, kind: output, shape index: {}]
  %s4 = sld [smem:[#allocation0]]
  $region26: #{tpu_custom_call.1} parent=0
    _
  %s6 = ssub.s32 1, %s4
  %s7 = scalar_select 0, %s6, %s4
  $region1: #{tpu_custom_call.1} parent=0
    #allocation2 [shape = 'u8[16384]{0}', space=vmem, size = 0x4000, scoped, tag = 'input window, operand 0, single buffered']
    #allocation3 [shape = 's32[1]{0}', space=sflag, size = 0x4, scoped, tag = 'scoped memory for tpu_custom_call.1']
    #allocation4 [shape = 's32[1]{0}', space=sflag, size = 0x4, scoped, tag = 'scoped memory for tpu_custom_call.1']
    #allocation5 [shape = 'u8[16384]{0}', space=vmem, size = 0x4000, scoped, tag = 'output window, operand 0, single buffered']
    %8 = vsyncpa [#allocation3], 0
    %9 = vsyncpa [#allocation4], 0
    // Predicated region
    $region2: #{tpu_custom_call.1} parent=1 // pred_check
      _
    $region3: #{tpu_custom_call.1} parent=1 // pred_check_branch
      %11 = sbr.rel (0) target = $region5
    $region4: #{tpu_custom_call.1} parent=1 // pred_region
      %s13 = ssub.s32 512, 512
      %14 = vsyncadd [#allocation3], %s13
      %s15 = sshll.u32 [#allocation2], 4
      %s16 = int_to_ptr.vmem [resolvable:$true] %s15
      %21 = dma.hbm_to_vmem [thread:$0]  %s0, 512, %s16, [#allocation3], 128, 128, 8
    $region5: #{tpu_custom_call.1} parent=1 // pred_fallthru
      _
    // Predicated region
    $region6: #{tpu_custom_call.1} parent=1 // pred_check
      _
    $region7: #{tpu_custom_call.1} parent=1 // pred_check_branch
      %23 = sbr.rel (0) target = $region9
    $region8: #{tpu_custom_call.1} parent=1 // pred_region
      _
    $region9: #{tpu_custom_call.1} parent=1 // pred_fallthru
      _
    // Predicated region
    $region10: #{tpu_custom_call.1} parent=1 // pred_check
      _
    $region11: #{tpu_custom_call.1} parent=1 // pred_check_branch
      %25 = sbr.rel (0) target = $region13
    $region12: #{tpu_custom_call.1} parent=1 // pred_region
      _
    $region13: #{tpu_custom_call.1} parent=1 // pred_fallthru
      _
    // Predicated region
    $region14: #{tpu_custom_call.1} parent=1 // pred_check
      _
    $region15: #{tpu_custom_call.1} parent=1 // pred_check_branch
      %27 = sbr.rel (0) target = $region17
    $region16: #{tpu_custom_call.1} parent=1 // pred_region
      %28 = dma.done [#allocation3], 512
    $region17: #{tpu_custom_call.1} parent=1 // pred_fallthru
      _
    %v29 = vld [vmem:[#allocation2] sm:$0xff]
    %v30 = vld [vmem:[#allocation2 + $0x8] sm:$0xff]
    %v31 = vld [vmem:[#allocation2 + $0x10] sm:$0xff]
    %v32 = vld [vmem:[#allocation2 + $0x18] sm:$0xff]
    %v33 = vlaneseq
    %v34 = vand.u32 %v33, 127
    %vm35 = vcmp.lt.s32.totalorder %v34, 0
    %v36 = vsub.s32 0, %v34
    %v37 = vsel %vm35, %v36, %v34
    %v38 = vshrl.u32 %v37, 4
    %v39 = vand.u32 %v37, 15
    %v40 = vsub.s32 0, %v39
    %v41 = vsel %vm35, %v40, %v39
    %vm42 = vcmp.ne.s32.totalorder %v41, 0
    %vm43 = vcmp.lt.s32.totalorder %v41, 0
    %vm44 = vmand %vm43, %vm42
    %v45 = vadd.s32 %v41, 16
    %v46 = vsel %vm44, %v45, %v41
    %vm47 = vcmp.eq.s32.totalorder %v46, 0
    %vm48 = vcmask 1047808
    %49 = vrot.lane.b32.xlu0 %v29, 32
    %v50 = vpop.permute.xlu0 %49
    %v51 = vsel %vm48, %v50, %v29
    %52 = vrot.lane.b32.xlu0 %v30, 32
    %v53 = vpop.permute.xlu0 %52
    %v54 = vsel %vm48, %v53, %v30
    %55 = vrot.lane.b32.xlu0 %v31, 32
    %v56 = vpop.permute.xlu0 %55
    %v57 = vsel %vm48, %v56, %v31
    %58 = vrot.lane.b32.xlu0 %v32, 32
    %v59 = vpop.permute.xlu0 %58
    %v60 = vsel %vm48, %v59, %v32
    %61 = vrot.lane.b32.xlu0 %v51, 32
    %v62 = vpop.permute.xlu0 %61
    %63 = vrot.lane.b32.xlu0 %v54, 32
    %v64 = vpop.permute.xlu0 %63
    %65 = vrot.lane.b32.xlu0 %v57, 32
    %v66 = vpop.permute.xlu0 %65
    %67 = vrot.lane.b32.xlu0 %v60, 32
    %v68 = vpop.permute.xlu0 %67
    %v69 = vsel %vm48, %v62, %v29
    %v70 = vsel %vm48, %v64, %v30
    %v71 = vsel %vm48, %v66, %v31
    %v72 = vsel %vm48, %v68, %v32
    %77 = vrot.lane.b32.xlu0 %v69, 97
    %v78 = vpop.permute.xlu0 %77
    %79 = vrot.lane.b32.xlu0 %v70, 97
    %v80 = vpop.permute.xlu0 %79
    %81 = vrot.lane.b32.xlu0 %v71, 97
    %v82 = vpop.permute.xlu0 %81
    %83 = vrot.lane.b32.xlu0 %v72, 97
    %v84 = vpop.permute.xlu0 %83
    %v89 = vsel %vm47, 0.0, %v78
    %v90 = vsel %vm47, 0.0, %v80
    %v91 = vsel %vm47, 0.0, %v82
    %v92 = vsel %vm47, 0.0, %v84
    %vm93 = vcmp.eq.s32.totalorder %v46, 15
    %94 = vrot.lane.b32.xlu0 %v69, 127
    %v95 = vpop.permute.xlu0 %94
    %96 = vrot.lane.b32.xlu0 %v70, 127
    %v97 = vpop.permute.xlu0 %96
    %98 = vrot.lane.b32.xlu0 %v71, 127
    %v99 = vpop.permute.xlu0 %98
    %100 = vrot.lane.b32.xlu0 %v72, 127
    %v101 = vpop.permute.xlu0 %100
    %v106 = vsel %vm93, 0.0, %v95
    %v107 = vsel %vm93, 0.0, %v97
    %v108 = vsel %vm93, 0.0, %v99
    %v109 = vsel %vm93, 0.0, %v101
    %v110 = vld [vmem:[%s1] sm:$0xff]
    %v111 = vld [vmem:[%s1 + $0x8] sm:$0xff]
    %v112 = vld [vmem:[%s1 + $0x10] sm:$0xff]
    %v113 = vld [vmem:[%s1 + $0x18] sm:$0xff]
    %v114 = vld [vmem:[%s1 + $0x20] sm:$0xff]
    %v115 = vld [vmem:[%s1 + $0x28] sm:$0xff]
    %v116 = vld [vmem:[%s1 + $0x30] sm:$0xff]
    %v117 = vld [vmem:[%s1 + $0x38] sm:$0xff]
    %v118 = vld [vmem:[%s2] sm:$0xff]
    %v119 = vld [vmem:[%s2 + $0x8] sm:$0xff]
    %v120 = vld [vmem:[%s2 + $0x10] sm:$0xff]
    %v121 = vld [vmem:[%s2 + $0x18] sm:$0xff]
    %v122 = vld [vmem:[%s2 + $0x20] sm:$0xff]
    %v123 = vld [vmem:[%s2 + $0x28] sm:$0xff]
    %v124 = vld [vmem:[%s2 + $0x30] sm:$0xff]
    %v125 = vld [vmem:[%s2 + $0x38] sm:$0xff]
    %127 = vset.pattern.permute.xlu0 0
    %128 = vperm.xlu0 %127, %v118
    %v129 = vpop.permute.xlu0 %128
    %132 = vset.pattern.permute.xlu0 0
    %133 = vperm.xlu0 %132, %v119
    %v134 = vpop.permute.xlu0 %133
    %137 = vset.pattern.permute.xlu0 0
    %138 = vperm.xlu0 %137, %v120
    %v139 = vpop.permute.xlu0 %138
    %142 = vset.pattern.permute.xlu0 0
    %143 = vperm.xlu0 %142, %v121
    %v144 = vpop.permute.xlu0 %143
    %147 = vset.pattern.permute.xlu0 0
    %148 = vperm.xlu0 %147, %v122
    %v149 = vpop.permute.xlu0 %148
    %152 = vset.pattern.permute.xlu0 0
    %153 = vperm.xlu0 %152, %v123
    %v154 = vpop.permute.xlu0 %153
    %157 = vset.pattern.permute.xlu0 0
    %158 = vperm.xlu0 %157, %v124
    %v159 = vpop.permute.xlu0 %158
    %162 = vset.pattern.permute.xlu0 0
    %163 = vperm.xlu0 %162, %v125
    %v164 = vpop.permute.xlu0 %163
    %vm166 = vcmask 785408
    %v168 = vsel %vm166, %v110, 0
    %v171 = vsel %vm166, %v111, 0
    %v174 = vsel %vm166, %v112, 0
    %v177 = vsel %vm166, %v113, 0
    %v180 = vsel %vm166, %v114, 0
    %v183 = vsel %vm166, %v115, 0
    %v186 = vsel %vm166, %v116, 0
    %v189 = vsel %vm166, %v117, 0
    %191 = vmatprep.subr.mxu0 0.0
    %192 = vmatpush1.msra.mxu0 %v89
    %193 = vmatprep.subr.mxu0 0.0
    %194 = vmatpush1.msra.mxu0 %v90
    %195 = vmatprep.subr.mxu0 0.0
    %196 = vmatpush1.msra.mxu0 %v91
    %197 = vmatprep.subr.mxu0 0.0
    %198 = vmatpush1.msra.mxu0 %v92
    %199 = vmatprep.subr.mxu0 0.0
    %200 = vmatpush1.msra.mxu0 %v29
    %201 = vmatprep.subr.mxu0 0.0
    %202 = vmatpush1.msra.mxu0 %v30
    %203 = vmatprep.subr.mxu0 0.0
    %204 = vmatpush1.msra.mxu0 %v31
    %205 = vmatprep.subr.mxu0 0.0
    %206 = vmatpush1.msra.mxu0 %v32
    %207 = vmatprep.subr.mxu0 0.0
    %208 = vmatpush1.msra.mxu0 %v106
    %209 = vmatprep.subr.mxu0 0.0
    %210 = vmatpush1.msra.mxu0 %v107
    %211 = vmatprep.subr.mxu0 0.0
    %212 = vmatpush1.msra.mxu0 %v108
    %213 = vmatprep.subr.mxu0 0.0
    %214 = vmatpush1.msra.mxu0 %v109
    %215 = vmatprep.subr.mxu0 0.0
    %216 = vmatpush1.msra.mxu0 0.0
    %217 = vmatprep.subr.mxu0 0.0
    %218 = vmatpush1.msra.mxu0 0.0
    %219 = vmatprep.subr.mxu0 0.0
    %220 = vmatpush1.msra.mxu0 0.0
    %221 = vmatprep.subr.mxu0 0.0
    %222 = vmatpush1.msra.mxu0 0.0
    %223 = vmatprep.subr.mxu0 0.0
    %224 = vmatpush1.msra.mxu0 0.0
    %225 = vmatprep.subr.mxu0 0.0
    %226 = vmatpush1.msra.mxu0 0.0
    %227 = vmatprep.subr.mxu0 0.0
    %228 = vmatpush1.msra.mxu0 0.0
    %229 = vmatprep.subr.mxu0 0.0
    %230 = vmatpush1.msra.mxu0 0.0
    %231 = vmatprep.subr.mxu0 0.0
    %232 = vmatpush1.msra.mxu0 0.0
    %233 = vmatprep.subr.mxu0 0.0
    %234 = vmatpush1.msra.mxu0 0.0
    %235 = vmatprep.subr.mxu0 0.0
    %236 = vmatpush1.msra.mxu0 0.0
    %237 = vmatprep.subr.mxu0 0.0
    %238 = vmatpush1.msra.mxu0 0.0
    %239 = vmatprep.subr.mxu0 0.0
    %240 = vmatpush1.msra.mxu0 0.0
    %241 = vmatprep.subr.mxu0 0.0
    %242 = vmatpush1.msra.mxu0 0.0
    %243 = vmatprep.subr.mxu0 0.0
    %244 = vmatpush1.msra.mxu0 0.0
    %245 = vmatprep.subr.mxu0 0.0
    %246 = vmatpush1.msra.mxu0 0.0
    %247 = vmatprep.subr.mxu0 0.0
    %248 = vmatpush1.msra.mxu0 0.0
    %249 = vmatprep.subr.mxu0 0.0
    %250 = vmatpush1.msra.mxu0 0.0
    %251 = vmatprep.subr.mxu0 0.0
    %252 = vmatpush1.msra.mxu0 0.0
    %253 = vmatprep.subr.mxu0 0.0
    %254 = vmatpush1.msra.mxu0 0.0
    %255 = vmatprep.mubr.f32.mxu0 0.0
    %256 = vmatmul.mubr.f32.gmra.mrb[0].mxu0 %v168
    %v257 = vpop.f32.mrb[0].mxu0
    %v258 = vadd.f32 %v129, %v257
    %v259 = vpop.f32.mrb[0].mxu0
    %260 = vmatprep.mubr.f32.mxu0 0.0
    %261 = vmatmul.mubr.f32.gmra.mrb[0].mxu0 %v171
    %v262 = vpop.f32.mrb[0].mxu0
    %v263 = vadd.f32 %v134, %v262
    %v264 = vpop.f32.mrb[0].mxu0
    %265 = vmatprep.mubr.f32.mxu0 0.0
    %266 = vmatmul.mubr.f32.gmra.mrb[0].mxu0 %v174
    %v267 = vpop.f32.mrb[0].mxu0
    %v268 = vadd.f32 %v139, %v267
    %v269 = vpop.f32.mrb[0].mxu0
    %270 = vmatprep.mubr.f32.mxu0 0.0
    %271 = vmatmul.mubr.f32.gmra.mrb[0].mxu0 %v177
    %v272 = vpop.f32.mrb[0].mxu0
    %v273 = vadd.f32 %v144, %v272
    %v274 = vpop.f32.mrb[0].mxu0
    %275 = vmatprep.mubr.f32.mxu0 0.0
    %276 = vmatmul.mubr.f32.gmra.mrb[0].mxu0 %v180
    %v277 = vpop.f32.mrb[0].mxu0
    %v278 = vadd.f32 %v149, %v277
    %v279 = vpop.f32.mrb[0].mxu0
    %280 = vmatprep.mubr.f32.mxu0 0.0
    %281 = vmatmul.mubr.f32.gmra.mrb[0].mxu0 %v183
    %v282 = vpop.f32.mrb[0].mxu0
    %v283 = vadd.f32 %v154, %v282
    %v284 = vpop.f32.mrb[0].mxu0
    %285 = vmatprep.mubr.f32.mxu0 0.0
    %286 = vmatmul.mubr.f32.gmra.mrb[0].mxu0 %v186
    %v287 = vpop.f32.mrb[0].mxu0
    %v288 = vadd.f32 %v159, %v287
    %v289 = vpop.f32.mrb[0].mxu0
    %290 = vmatprep.mubr.f32.mxu0 0.0
    %291 = vmatmul.mubr.f32.gmra.mrb[0].mxu0 %v189
    %v292 = vpop.f32.mrb[0].mxu0
    %v293 = vadd.f32 %v164, %v292
    %v294 = vpop.f32.mrb[0].mxu0
    %295 = vdwg.mxu0
    %v296 = vxor.u32 %v258, 2147483648
    %v297 = vxor.u32 %v263, 2147483648
    %v298 = vxor.u32 %v268, 2147483648
    %v299 = vxor.u32 %v273, 2147483648
    %v300 = vmul.f32 %v296, 1.442695
    %v301 = vpow.pop %v300
    %v302 = vmul.f32 %v297, 1.442695
    %v303 = vpow.pop %v302
    %v304 = vmul.f32 %v298, 1.442695
    %v305 = vpow.pop %v304
    %v306 = vmul.f32 %v299, 1.442695
    %v307 = vpow.pop %v306
    %v308 = vadd.f32 %v301, 1.0
    %v309 = vadd.f32 %v303, 1.0
    %v310 = vadd.f32 %v305, 1.0
    %v311 = vadd.f32 %v307, 1.0
    %v312 = vrcp.pop %v308
    %v313 = vmul.f32 1.0, %v312
    %v314 = vrcp.pop %v309
    %v315 = vmul.f32 1.0, %v314
    %v316 = vrcp.pop %v310
    %v317 = vmul.f32 1.0, %v316
    %v318 = vrcp.pop %v311
    %v319 = vmul.f32 1.0, %v318
    %v320 = vmax.f32 %v278, 0.0
    %v321 = vmax.f32 %v283, 0.0
    %v322 = vmax.f32 %v288, 0.0
    %v323 = vmax.f32 %v293, 0.0
    %v324 = vmul.f32 %v313, %v320
    %v325 = vmul.f32 %v315, %v321
    %v326 = vmul.f32 %v317, %v322
    %v327 = vmul.f32 %v319, %v323
    %vm328 = vcmask 261120
    %329 = vst.msk [vmem:[#allocation5] sm:$0xff] %vm328, %v324
    %330 = vst.msk [vmem:[#allocation5 + $0x8] sm:$0xff] %vm328, %v325
    %331 = vst.msk [vmem:[#allocation5 + $0x10] sm:$0xff] %vm328, %v326
    %332 = vst.msk [vmem:[#allocation5 + $0x18] sm:$0xff] %vm328, %v327
    // Predicated region
    $region18: #{tpu_custom_call.1} parent=1 // pred_check
      _
    $region19: #{tpu_custom_call.1} parent=1 // pred_check_branch
      %334 = sbr.rel (0) target = $region21
    $region20: #{tpu_custom_call.1} parent=1 // pred_region
      %s336 = ssub.s32 512, 512
      %337 = vsyncadd [#allocation4], %s336
      %s338 = sshll.u32 [#allocation5], 4
      %s339 = int_to_ptr.vmem [resolvable:$true] %s338
      %344 = dma.vmem_to_hbm [thread:$0]  %s339, 512, %s3, [#allocation4], 128, 128, 8
    $region21: #{tpu_custom_call.1} parent=1 // pred_fallthru
      _
    // Predicated region
    $region22: #{tpu_custom_call.1} parent=1 // pred_check
      _
    $region23: #{tpu_custom_call.1} parent=1 // pred_check_branch
      %346 = sbr.rel (0) target = $region25
    $region24: #{tpu_custom_call.1} parent=1 // pred_region
      %347 = dma.done [#allocation4], 512
    $region25: #{tpu_custom_call.1} parent=1 // pred_fallthru
      _
    %348 = vsyncpa [#allocation3], 1
    %349 = vsyncpa [#allocation4], 1

</llo_original>
